<compile_context>
chip_gen: v6e
topology: v6e:2x2x1
jax: 0.10.0
libtpu: 0.0.40
codegen_flags: <defaults>
</compile_context>

<pallas_src>
import jax
import jax.numpy as jnp
from jax.experimental import pallas as pl
from jax.experimental.pallas import tpu as pltpu

# ---------------- model sizes (small, consistent with an image classifier) ---
N, CIN, H, W = 2, 4, 16, 16      # input  (NCHW in PyTorch convention)
CHID = 32                        # conv output channels
NCLS = 8                         # classifier classes
KH = KW = 3                      # conv kernel

K = KH * KW * CIN                        # 36   im2col depth
KPAD = ((K + 1 + 15) // 16) * 16         # 48   K + bias row, bf16 sublane tile
NHW = N * H * W                          # 512  pixels on lanes
NCLS_PAD = 128                           # lane-dense logits
NPAD = 8                                 # f32 sublane tile for the output


def classifier_kernel(p_ref, w2_ref, pool_ref, wfc_ref, bfc_ref, out_ref):
    """Whole-batch classifier forward (single gridless invocation).

    p_ref    : (KPAD, N*H*W)  bf16  K-major im2col patches; rows >= K are 1.0
    w2_ref   : (CHID, KPAD)   bf16  packed conv weights; column K = conv bias
    pool_ref : (N*H*W, NPAD)  bf16  block-diagonal 1/(H*W) pooling matrix
    wfc_ref  : (CHID, NCLS_PAD) bf16  FC weights (class axis lane-padded)
    bfc_ref  : (1, NCLS_PAD)  f32   FC bias
    out_ref  : (NPAD, NCLS_PAD) f32 padded logits (full-tile store)
    """
    # conv as ONE bf16 GEMM; the conv bias rides the MXU via the ones row.
    acc = jnp.dot(w2_ref[...], p_ref[...],
                  preferred_element_type=jnp.float32)          # (CHID, NHW) f32
    acc = jnp.maximum(acc, 0.0)                                 # ReLU, f32 VPU

    # global average pool as one MXU matmul (block-diag 1/(H*W) matrix;
    # columns >= N are zero so the padded logit rows stay benign).
    pooled = jnp.dot(acc.astype(jnp.bfloat16), pool_ref[...],
                     preferred_element_type=jnp.float32)        # (CHID, NPAD)

    # FC: contract CHID of both operands -> (NPAD, NCLS_PAD)
    logits = jax.lax.dot_general(
        pooled.astype(jnp.bfloat16), wfc_ref[...],
        dimension_numbers=(((0,), (0,)), ((), ())),
        preferred_element_type=jnp.float32)

    out_ref[...] = logits + bfc_ref[...]


def prepare_classifier_params(wconv, bconv, wfc, bfc):
    """One-time weight repacking (hoisted out of the per-forward path)."""
    # conv weights as a single (CHID, KPAD) GEMM operand; conv bias folded
    # into column K (multiplies the all-ones padded patch row), tail zero.
    w_main = wconv.reshape(K, CHID).T.astype(jnp.bfloat16)            # (CHID, K)
    bias_col = bconv.reshape(CHID, 1).astype(jnp.bfloat16)
    tail = jnp.zeros((CHID, KPAD - K - 1), jnp.bfloat16)
    w2 = jnp.concatenate([w_main, bias_col, tail], axis=1)            # (CHID, KPAD)

    # block-diagonal average-pool matrix: pool[p, n] = 1/(H*W) iff pixel p
    # belongs to image n (1/256 is exact in bf16; columns N..NPAD-1 are zero).
    img_of_pixel = jnp.arange(NHW)[:, None] // (H * W)
    pool = jnp.where(img_of_pixel == jnp.arange(NPAD)[None, :],
                     1.0 / float(H * W), 0.0).astype(jnp.bfloat16)    # (NHW, NPAD)

    wfc_p = jnp.pad(wfc.astype(jnp.bfloat16),
                    ((0, 0), (0, NCLS_PAD - NCLS)))                   # (CHID, 128)
    bfc_p = jnp.pad(bfc.astype(jnp.float32)[None, :],
                    ((0, 0), (0, NCLS_PAD - NCLS)))                   # (1, 128)
    return w2, pool, wfc_p, bfc_p


@jax.jit
def classifier_forward(x_nchw, w2, pool, wfc_p, bfc_p):
    n, cin, h, w = x_nchw.shape

    # ---- K-major im2col: no transpose of the patch matrix, single pad ------
    x_c = jnp.transpose(x_nchw, (1, 0, 2, 3)).astype(jnp.float32)     # (CIN,N,H,W)
    xpad = jnp.pad(x_c, ((0, 0), (0, 0), (1, 1), (1, 1)))
    views = [xpad[:, :, dh:dh + h, dw:dw + w]
             for dh in range(KH) for dw in range(KW)]                 # (CIN,N,H,W) each
    patches = jnp.stack(views, axis=0).reshape(KH * KW * cin, n * h * w)
    patches = patches.astype(jnp.bfloat16)                            # (K, NHW)
    # pad K -> KPAD with 1.0: row K multiplies the conv-bias column of w2,
    # the remaining padded rows hit zero weight columns (harmless).
    p = jnp.pad(patches, ((0, KPAD - KH * KW * cin), (0, 0)),
                constant_values=1.0)                                  # (KPAD, NHW)

    flops = (2 * CHID * KPAD * (n * h * w)            # conv GEMM
             + 2 * CHID * (n * h * w) * NPAD          # pooling GEMM
             + 2 * NPAD * CHID * NCLS_PAD)            # FC GEMM
    bytes_accessed = ((p.size + w2.size + pool.size + wfc_p.size) * 2
                      + bfc_p.size * 4 + NPAD * NCLS_PAD * 4)

    logits_pad = pl.pallas_call(
        classifier_kernel,
        out_shape=jax.ShapeDtypeStruct((NPAD, NCLS_PAD), jnp.float32),
        in_specs=[pl.BlockSpec(memory_space=pltpu.MemorySpace.VMEM)] * 5,
        out_specs=pl.BlockSpec(memory_space=pltpu.MemorySpace.VMEM),
        cost_estimate=pl.CostEstimate(flops=flops, transcendentals=0,
                                      bytes_accessed=bytes_accessed),
    )(p, w2, pool, wfc_p, bfc_p)

    return logits_pad[:n, :NCLS]


def reference_forward(x_nchw, wconv, bconv, wfc, bfc):
    """Plain-JAX f32 reference of the same classifier (for a sanity check)."""
    x = jnp.transpose(x_nchw, (0, 2, 3, 1)).astype(jnp.float32)
    xp = jnp.pad(x, ((0, 0), (1, 1), (1, 1), (0, 0)))
    acc = jnp.zeros((x.shape[0], H, W, CHID), jnp.float32)
    for dh in range(KH):
        for dw in range(KW):
            acc = acc + jnp.einsum('nhwc,cd->nhwd',
                                   xp[:, dh:dh + H, dw:dw + W, :],
                                   wconv[dh, dw])
    acc = jnp.maximum(acc + bconv[None, None, None, :], 0.0)
    pooled = acc.mean(axis=(1, 2))
    return pooled @ wfc + bfc[None, :]


if __name__ == "__main__":
    key = jax.random.PRNGKey(0)
    kx, kw1, kb1, kw2, kb2 = jax.random.split(key, 5)

    x = jax.random.normal(kx, (N, CIN, H, W), dtype=jnp.float32)   # NCHW input
    wconv = jax.random.normal(kw1, (KH, KW, CIN, CHID), jnp.float32) * 0.1
    bconv = jax.random.normal(kb1, (CHID,), jnp.float32) * 0.1
    wfc = jax.random.normal(kw2, (CHID, NCLS), jnp.float32) * 0.1
    bfc = jax.random.normal(kb2, (NCLS,), jnp.float32) * 0.1

    # one-time weight packing (model init), then the hot forward path
    packed = prepare_classifier_params(wconv, bconv, wfc, bfc)
    packed = jax.tree_util.tree_map(jax.block_until_ready, packed)

    logits = classifier_forward(x, *packed)
    jax.block_until_ready(logits)

    ref = reference_forward(x, wconv, bconv, wfc, bfc)
    assert logits.shape == (N, NCLS)
    # bf16 MXU operands (incl. folded bias / pooling) with f32 accumulation
    assert jnp.allclose(logits, ref, atol=2e-2, rtol=2e-2), "mismatch vs reference"

    print("KERNEL_OK")
</pallas_src>

<mosaic_0001>
module attributes {stable_mosaic.version = 11 : i64} {
  func.func @classifier_kernel(%arg0: memref<48x512xbf16, #tpu.memory_space<vmem>>, %arg1: memref<32x48xbf16, #tpu.memory_space<vmem>>, %arg2: memref<512x8xbf16, #tpu.memory_space<vmem>>, %arg3: memref<32x128xbf16, #tpu.memory_space<vmem>>, %arg4: memref<1x128xf32, #tpu.memory_space<vmem>>, %arg5: memref<8x128xf32, #tpu.memory_space<vmem>>) attributes {dimension_semantics = [], scalar_prefetch = 0 : i64, scratch_operands = 0 : i64, tpu.core_type = #tpu.core_type<tc>} {
    %c0 = arith.constant 0 : index
    %c0_0 = arith.constant 0 : index
    %0 = vector.load %arg1[%c0, %c0_0] : memref<32x48xbf16, #tpu.memory_space<vmem>>, vector<32x48xbf16>
    %c0_1 = arith.constant 0 : index
    %c0_2 = arith.constant 0 : index
    %1 = vector.load %arg0[%c0_1, %c0_2] : memref<48x512xbf16, #tpu.memory_space<vmem>>, vector<48x512xbf16>
    %cst = arith.constant dense<0.000000e+00> : vector<32x512xf32>
    %2 = tpu.matmul %0, %1, %cst {dimension_numbers = #tpu.dot_dimension_numbers<[1], [0], [0], [1], [0, 0, 1, 1], [], []>} : vector<32x48xbf16>, vector<48x512xbf16>, vector<32x512xf32> -> vector<32x512xf32>
    %cst_3 = arith.constant 0.000000e+00 : f32
    %3 = vector.broadcast %cst_3 : f32 to vector<32x512xf32>
    %4 = arith.maximumf %2, %3 : vector<32x512xf32>
    %5 = arith.truncf %4 : vector<32x512xf32> to vector<32x512xbf16>
    %c0_4 = arith.constant 0 : index
    %c0_5 = arith.constant 0 : index
    %6 = vector.load %arg2[%c0_4, %c0_5] : memref<512x8xbf16, #tpu.memory_space<vmem>>, vector<512x8xbf16>
    %cst_6 = arith.constant dense<0.000000e+00> : vector<32x8xf32>
    %7 = tpu.matmul %5, %6, %cst_6 {dimension_numbers = #tpu.dot_dimension_numbers<[1], [0], [0], [1], [0, 0, 1, 1], [], []>} : vector<32x512xbf16>, vector<512x8xbf16>, vector<32x8xf32> -> vector<32x8xf32>
    %8 = arith.truncf %7 : vector<32x8xf32> to vector<32x8xbf16>
    %c0_7 = arith.constant 0 : index
    %c0_8 = arith.constant 0 : index
    %9 = vector.load %arg3[%c0_7, %c0_8] : memref<32x128xbf16, #tpu.memory_space<vmem>>, vector<32x128xbf16>
    %cst_9 = arith.constant dense<0.000000e+00> : vector<8x128xf32>
    %10 = tpu.matmul %8, %9, %cst_9 {dimension_numbers = #tpu.dot_dimension_numbers<[0], [0], [1], [1], [0, 1, 1, 1], [], []>} : vector<32x8xbf16>, vector<32x128xbf16>, vector<8x128xf32> -> vector<8x128xf32>
    %c0_10 = arith.constant 0 : index
    %c0_11 = arith.constant 0 : index
    %11 = vector.load %arg4[%c0_10, %c0_11] : memref<1x128xf32, #tpu.memory_space<vmem>>, vector<1x128xf32>
    %12 = vector.broadcast %11 : vector<1x128xf32> to vector<8x128xf32>
    %13 = arith.addf %10, %12 : vector<8x128xf32>
    %c0_12 = arith.constant 0 : index
    %c0_13 = arith.constant 0 : index
    %14 = vector.load %arg5[%c0_12, %c0_13] : memref<8x128xf32, #tpu.memory_space<vmem>>, vector<8x128xf32>
    tpu.vector_store %arg5[%c0_12, %c0_13], %13 {strides = array<i32>} : memref<8x128xf32, #tpu.memory_space<vmem>>, vector<8x128xf32>,
    return
  }
}

</mosaic_0001>

<llo_original>
// kernel: classifier_forward.1
$region0: #{classifier_forward.1}
  #allocation0 [shape = 'u32[]', space=smem, size = 0x4, offset = 0x4, fixed_abs, tag = 'smem constant byte address 0x4 - core index']
  #allocation1 [shape = 'u32[144,128]{1,0:T(1,128)}', space=vmem, size = 0x12000, scoped, tag = 'internal scratch']
  %s0 = inlined_call_operand.vmem [shape: bf16[48,512], index: 0, kind: input, shape index: {}]
  %s1 = inlined_call_operand.vmem [shape: bf16[32,48], index: 1, kind: input, shape index: {}]
  %s2 = inlined_call_operand.vmem [shape: bf16[512,8], index: 2, kind: input, shape index: {}]
  %s3 = inlined_call_operand.vmem [shape: bf16[32,128], index: 3, kind: input, shape index: {}]
  %s4 = inlined_call_operand.vmem [shape: f32[1,128], index: 4, kind: input, shape index: {}]
  %s5 = inlined_call_operand.vmem [shape: f32[8,128], index: 5, kind: output, shape index: {}]
  %s6 = sld [smem:[#allocation0]]
  $region30: #{classifier_forward.1} parent=0
    _
  %s8 = ssub.s32 1, %s6
  %s9 = scalar_select 0, %s8, %s6
  // Predicated region
  $region2: #{classifier_forward.1} parent=0 // pred_check
    _
  $region3: #{classifier_forward.1} parent=0 // pred_check_branch
    %11 = sbr.rel (0) target = $region5
  $region4: #{classifier_forward.1} parent=0 // pred_region
    _
  $region5: #{classifier_forward.1} parent=0 // pred_fallthru
    _
  // Predicated region
  $region6: #{classifier_forward.1} parent=0 // pred_check
    _
  $region7: #{classifier_forward.1} parent=0 // pred_check_branch
    %13 = sbr.rel (0) target = $region9
  $region8: #{classifier_forward.1} parent=0 // pred_region
    _
  $region9: #{classifier_forward.1} parent=0 // pred_fallthru
    _
  // Predicated region
  $region10: #{classifier_forward.1} parent=0 // pred_check
    _
  $region11: #{classifier_forward.1} parent=0 // pred_check_branch
    %15 = sbr.rel (0) target = $region13
  $region12: #{classifier_forward.1} parent=0 // pred_region
    _
  $region13: #{classifier_forward.1} parent=0 // pred_fallthru
    _
  // Predicated region
  $region14: #{classifier_forward.1} parent=0 // pred_check
    _
  $region15: #{classifier_forward.1} parent=0 // pred_check_branch
    %17 = sbr.rel (0) target = $region17
  $region16: #{classifier_forward.1} parent=0 // pred_region
    _
  $region17: #{classifier_forward.1} parent=0 // pred_fallthru
    _
  // Predicated region
  $region18: #{classifier_forward.1} parent=0 // pred_check
    _
  $region19: #{classifier_forward.1} parent=0 // pred_check_branch
    %19 = sbr.rel (0) target = $region21
  $region20: #{classifier_forward.1} parent=0 // pred_region
    _
  $region21: #{classifier_forward.1} parent=0 // pred_fallthru
    _
  %v21 = vld [vmem:[%s1] sm:$0xf]
  %v22 = vld [vmem:[%s1 + $0x4] sm:$0xf]
  %v23 = vld [vmem:[%s1 + $0x8] sm:$0xf]
  %v24 = vld [vmem:[%s1 + $0xc] sm:$0xf]
  %v25 = vld [vmem:[%s0] sm:$0xff]
  %v26 = vld [vmem:[%s0 + $0x8] sm:$0xff]
  %v27 = vld [vmem:[%s0 + $0x10] sm:$0xff]
  %v28 = vld [vmem:[%s0 + $0x18] sm:$0xff]
  %v29 = vld [vmem:[%s0 + $0x20] sm:$0xff]
  %v30 = vld [vmem:[%s0 + $0x28] sm:$0xff]
  %v31 = vld [vmem:[%s0 + $0x30] sm:$0xff]
  %v32 = vld [vmem:[%s0 + $0x38] sm:$0xff]
  %v33 = vld [vmem:[%s0 + $0x40] sm:$0xff]
  %v34 = vld [vmem:[%s0 + $0x48] sm:$0xff]
  %v35 = vld [vmem:[%s0 + $0x50] sm:$0xff]
  %v36 = vld [vmem:[%s0 + $0x58] sm:$0xff]
  %v41 = vunpack.c.l.b16 %v21
  %v42 = vunpack.c.l.b16 %v22
  %v43 = vunpack.c.l.b16 %v23
  %v44 = vunpack.c.l.b16 %v24
  %v45 = vpack.c.b16 %v42, %v41
  %v46 = vpack.c.b16 %v44, %v43
  %v59 = vunpack.c.l.b16 %v25
  %v60 = vunpack.c.h.b16 %v25
  %v61 = vunpack.c.l.b16 %v26
  %v62 = vunpack.c.h.b16 %v26
  %v63 = vunpack.c.l.b16 %v27
  %v64 = vunpack.c.h.b16 %v27
  %v65 = vunpack.c.l.b16 %v28
  %v66 = vunpack.c.h.b16 %v28
  %v67 = vunpack.c.l.b16 %v29
  %v68 = vunpack.c.h.b16 %v29
  %v69 = vunpack.c.l.b16 %v30
  %v70 = vunpack.c.h.b16 %v30
  %v71 = vunpack.c.l.b16 %v31
  %v72 = vunpack.c.h.b16 %v31
  %v73 = vunpack.c.l.b16 %v32
  %v74 = vunpack.c.h.b16 %v32
  %v75 = vunpack.c.l.b16 %v33
  %v76 = vunpack.c.h.b16 %v33
  %v77 = vunpack.c.l.b16 %v34
  %v78 = vunpack.c.h.b16 %v34
  %v79 = vunpack.c.l.b16 %v35
  %v80 = vunpack.c.h.b16 %v35
  %v81 = vunpack.c.l.b16 %v36
  %v82 = vunpack.c.h.b16 %v36
  %v83 = vpack.c.b16 %v63, %v59
  %v84 = vpack.c.b16 %v64, %v60
  %v85 = vpack.c.b16 %v65, %v61
  %v86 = vpack.c.b16 %v66, %v62
  %v87 = vpack.c.b16 %v71, %v67
  %v88 = vpack.c.b16 %v72, %v68
  %v89 = vpack.c.b16 %v73, %v69
  %v90 = vpack.c.b16 %v74, %v70
  %v91 = vpack.c.b16 %v79, %v75
  %v92 = vpack.c.b16 %v80, %v76
  %v93 = vpack.c.b16 %v81, %v77
  %v94 = vpack.c.b16 %v82, %v78
  %vm107 = vcmask 392192
  %v109 = vsel %vm107, %v45, 0
  %v112 = vsel %vm107, %v46, 0
  %114 = vmatprep.subr.bf16.mxu0 0
  %115 = vmatpush1.bf16.msra.mxu0 0
  %116 = vmatprep.subr.bf16.mxu0 0
  %117 = vmatpush1.bf16.msra.mxu0 0
  %118 = vmatprep.subr.bf16.mxu0 0
  %119 = vmatpush1.bf16.msra.mxu0 0
  %120 = vmatprep.subr.bf16.mxu0 0
  %121 = vmatpush1.bf16.msra.mxu0 0
  %122 = vmatprep.subr.bf16.mxu0 0
  %123 = vmatpush1.bf16.msra.mxu0 0
  %124 = vmatprep.subr.bf16.mxu0 %v92
  %125 = vmatpush1.bf16.msra.mxu0 %v91
  %126 = vmatprep.subr.bf16.mxu0 %v88
  %127 = vmatpush1.bf16.msra.mxu0 %v87
  %128 = vmatprep.subr.bf16.mxu0 %v84
  %129 = vmatpush1.bf16.msra.mxu0 %v83
  %130 = vmatprep.subr.bf16.mxu0 0
  %131 = vmatpush2.bf16.msra.mxu0 0
  %132 = vmatprep.subr.bf16.mxu0 0
  %133 = vmatpush2.bf16.msra.mxu0 0
  %134 = vmatprep.subr.bf16.mxu0 0
  %135 = vmatpush2.bf16.msra.mxu0 0
  %136 = vmatprep.subr.bf16.mxu0 0
  %137 = vmatpush2.bf16.msra.mxu0 0
  %138 = vmatprep.subr.bf16.mxu0 0
  %139 = vmatpush2.bf16.msra.mxu0 0
  %140 = vmatprep.subr.bf16.mxu0 0
  %141 = vmatpush2.bf16.msra.mxu0 0
  %142 = vmatprep.subr.bf16.mxu0 0
  %143 = vmatpush2.bf16.msra.mxu0 0
  %144 = vmatprep.subr.bf16.mxu0 0
  %145 = vmatpush2.bf16.msra.mxu0 0
  %146 = vmatprep.mubr.bf16.mxu0 0
  %147 = vmatmul.mubr.bf16.gmra.mxu0 %v109
  %v148 = vpop.f32.mrf.mxu0
  %v149 = vadd.f32 0.0, %v148
  %v150 = vpop.f32.mrf.mxu0
  %v151 = vadd.f32 0.0, %v150
  %v152 = vpop.f32.mrf.mxu0
  %v153 = vadd.f32 0.0, %v152
  %v154 = vpop.f32.mrf.mxu0
  %v155 = vadd.f32 0.0, %v154
  %156 = vmatprep.mubr.bf16.mxu0 0
  %157 = vmatmul.mubr.bf16.gmra.mxu0 %v112
  %v158 = vpop.f32.mrf.mxu0
  %v159 = vadd.f32 0.0, %v158
  %v160 = vpop.f32.mrf.mxu0
  %v161 = vadd.f32 0.0, %v160
  %v162 = vpop.f32.mrf.mxu0
  %v163 = vadd.f32 0.0, %v162
  %v164 = vpop.f32.mrf.mxu0
  %v165 = vadd.f32 0.0, %v164
  %166 = vdwg.mxu0
  %167 = vmatprep.subr.bf16.mxu0 0
  %168 = vmatpush1.bf16.msra.mxu0 0
  %169 = vmatprep.subr.bf16.mxu0 0
  %170 = vmatpush1.bf16.msra.mxu0 0
  %171 = vmatprep.subr.bf16.mxu0 0
  %172 = vmatpush1.bf16.msra.mxu0 0
  %173 = vmatprep.subr.bf16.mxu0 0
  %174 = vmatpush1.bf16.msra.mxu0 0
  %175 = vmatprep.subr.bf16.mxu0 0
  %176 = vmatpush1.bf16.msra.mxu0 0
  %177 = vmatprep.subr.bf16.mxu0 %v94
  %178 = vmatpush1.bf16.msra.mxu0 %v93
  %179 = vmatprep.subr.bf16.mxu0 %v90
  %180 = vmatpush1.bf16.msra.mxu0 %v89
  %181 = vmatprep.subr.bf16.mxu0 %v86
  %182 = vmatpush1.bf16.msra.mxu0 %v85
  %183 = vmatprep.subr.bf16.mxu0 0
  %184 = vmatpush2.bf16.msra.mxu0 0
  %185 = vmatprep.subr.bf16.mxu0 0
  %186 = vmatpush2.bf16.msra.mxu0 0
  %187 = vmatprep.subr.bf16.mxu0 0
  %188 = vmatpush2.bf16.msra.mxu0 0
  %189 = vmatprep.subr.bf16.mxu0 0
  %190 = vmatpush2.bf16.msra.mxu0 0
  %191 = vmatprep.subr.bf16.mxu0 0
  %192 = vmatpush2.bf16.msra.mxu0 0
  %193 = vmatprep.subr.bf16.mxu0 0
  %194 = vmatpush2.bf16.msra.mxu0 0
  %195 = vmatprep.subr.bf16.mxu0 0
  %196 = vmatpush2.bf16.msra.mxu0 0
  %197 = vmatprep.subr.bf16.mxu0 0
  %198 = vmatpush2.bf16.msra.mxu0 0
  %199 = vmatprep.mubr.bf16.mxu0 0
  %200 = vmatmul.mubr.bf16.gmra.mxu0 %v109
  %v201 = vpop.f32.mrf.mxu0
  %v202 = vadd.f32 0.0, %v201
  %v203 = vpop.f32.mrf.mxu0
  %v204 = vadd.f32 0.0, %v203
  %v205 = vpop.f32.mrf.mxu0
  %v206 = vadd.f32 0.0, %v205
  %v207 = vpop.f32.mrf.mxu0
  %v208 = vadd.f32 0.0, %v207
  %209 = vmatprep.mubr.bf16.mxu0 0
  %210 = vmatmul.mubr.bf16.gmra.mxu0 %v112
  %v211 = vpop.f32.mrf.mxu0
  %v212 = vadd.f32 0.0, %v211
  %v213 = vpop.f32.mrf.mxu0
  %v214 = vadd.f32 0.0, %v213
  %v215 = vpop.f32.mrf.mxu0
  %v216 = vadd.f32 0.0, %v215
  %v217 = vpop.f32.mrf.mxu0
  %v218 = vadd.f32 0.0, %v217
  %219 = vdwg.mxu0
  %v220 = vmax.f32 %v149, 0.0
  %v221 = vmax.f32 %v151, 0.0
  %v222 = vmax.f32 %v202, 0.0
  %v223 = vmax.f32 %v204, 0.0
  %v224 = vmax.f32 %v153, 0.0
  %v225 = vmax.f32 %v155, 0.0
  %v226 = vmax.f32 %v206, 0.0
  %v227 = vmax.f32 %v208, 0.0
  %v228 = vmax.f32 %v159, 0.0
  %v229 = vmax.f32 %v161, 0.0
  %v230 = vmax.f32 %v212, 0.0
  %v231 = vmax.f32 %v214, 0.0
  %v232 = vmax.f32 %v163, 0.0
  %v233 = vmax.f32 %v165, 0.0
  %v234 = vmax.f32 %v216, 0.0
  %v235 = vmax.f32 %v218, 0.0
  %v236 = vpack.c.bf16 %v224, %v220
  %v237 = vpack.c.bf16 %v225, %v221
  %v238 = vpack.c.bf16 %v226, %v222
  %v239 = vpack.c.bf16 %v227, %v223
  %v240 = vpack.c.bf16 %v232, %v228
  %v241 = vpack.c.bf16 %v233, %v229
  %v242 = vpack.c.bf16 %v234, %v230
  %v243 = vpack.c.bf16 %v235, %v231
  %v244 = vld [vmem:[%s2] sm:$0xf]
  %v245 = vld [vmem:[%s2 + $0x4] sm:$0xf]
  %v246 = vld [vmem:[%s2 + $0x8] sm:$0xf]
  %v247 = vld [vmem:[%s2 + $0xc] sm:$0xf]
  %v248 = vld [vmem:[%s2 + $0x10] sm:$0xf]
  %v249 = vld [vmem:[%s2 + $0x14] sm:$0xf]
  %v250 = vld [vmem:[%s2 + $0x18] sm:$0xf]
  %v251 = vld [vmem:[%s2 + $0x1c] sm:$0xf]
  %v252 = vld [vmem:[%s2 + $0x20] sm:$0xf]
  %v253 = vld [vmem:[%s2 + $0x24] sm:$0xf]
  %v254 = vld [vmem:[%s2 + $0x28] sm:$0xf]
  %v255 = vld [vmem:[%s2 + $0x2c] sm:$0xf]
  %v256 = vld [vmem:[%s2 + $0x30] sm:$0xf]
  %v257 = vld [vmem:[%s2 + $0x34] sm:$0xf]
  %v258 = vld [vmem:[%s2 + $0x38] sm:$0xf]
  %v259 = vld [vmem:[%s2 + $0x3c] sm:$0xf]
  %v260 = vld [vmem:[%s2 + $0x40] sm:$0xf]
  %v261 = vld [vmem:[%s2 + $0x44] sm:$0xf]
  %v262 = vld [vmem:[%s2 + $0x48] sm:$0xf]
  %v263 = vld [vmem:[%s2 + $0x4c] sm:$0xf]
  %v264 = vld [vmem:[%s2 + $0x50] sm:$0xf]
  %v265 = vld [vmem:[%s2 + $0x54] sm:$0xf]
  %v266 = vld [vmem:[%s2 + $0x58] sm:$0xf]
  %v267 = vld [vmem:[%s2 + $0x5c] sm:$0xf]
  %v268 = vld [vmem:[%s2 + $0x60] sm:$0xf]
  %v269 = vld [vmem:[%s2 + $0x64] sm:$0xf]
  %v270 = vld [vmem:[%s2 + $0x68] sm:$0xf]
  %v271 = vld [vmem:[%s2 + $0x6c] sm:$0xf]
  %v272 = vld [vmem:[%s2 + $0x70] sm:$0xf]
  %v273 = vld [vmem:[%s2 + $0x74] sm:$0xf]
  %v274 = vld [vmem:[%s2 + $0x78] sm:$0xf]
  %v275 = vld [vmem:[%s2 + $0x7c] sm:$0xf]
  %v276 = vld [vmem:[%s2 + $0x80] sm:$0xf]
  %v277 = vld [vmem:[%s2 + $0x84] sm:$0xf]
  %v278 = vld [vmem:[%s2 + $0x88] sm:$0xf]
  %v279 = vld [vmem:[%s2 + $0x8c] sm:$0xf]
  %v280 = vld [vmem:[%s2 + $0x90] sm:$0xf]
  %v281 = vld [vmem:[%s2 + $0x94] sm:$0xf]
  %v282 = vld [vmem:[%s2 + $0x98] sm:$0xf]
  %v283 = vld [vmem:[%s2 + $0x9c] sm:$0xf]
  %v284 = vld [vmem:[%s2 + $0xa0] sm:$0xf]
  %v285 = vld [vmem:[%s2 + $0xa4] sm:$0xf]
  %v286 = vld [vmem:[%s2 + $0xa8] sm:$0xf]
  %v287 = vld [vmem:[%s2 + $0xac] sm:$0xf]
  %v288 = vld [vmem:[%s2 + $0xb0] sm:$0xf]
  %v289 = vld [vmem:[%s2 + $0xb4] sm:$0xf]
  %v290 = vld [vmem:[%s2 + $0xb8] sm:$0xf]
  %v291 = vld [vmem:[%s2 + $0xbc] sm:$0xf]
  %v292 = vld [vmem:[%s2 + $0xc0] sm:$0xf]
  %v293 = vld [vmem:[%s2 + $0xc4] sm:$0xf]
  %v294 = vld [vmem:[%s2 + $0xc8] sm:$0xf]
  %v295 = vld [vmem:[%s2 + $0xcc] sm:$0xf]
  %v296 = vld [vmem:[%s2 + $0xd0] sm:$0xf]
  %v297 = vld [vmem:[%s2 + $0xd4] sm:$0xf]
  %v298 = vld [vmem:[%s2 + $0xd8] sm:$0xf]
  %v299 = vld [vmem:[%s2 + $0xdc] sm:$0xf]
  %v300 = vld [vmem:[%s2 + $0xe0] sm:$0xf]
  %v301 = vld [vmem:[%s2 + $0xe4] sm:$0xf]
  %v302 = vld [vmem:[%s2 + $0xe8] sm:$0xf]
  %v303 = vld [vmem:[%s2 + $0xec] sm:$0xf]
  %v304 = vld [vmem:[%s2 + $0xf0] sm:$0xf]
  %v305 = vld [vmem:[%s2 + $0xf4] sm:$0xf]
  %v306 = vld [vmem:[%s2 + $0xf8] sm:$0xf]
  %v307 = vld [vmem:[%s2 + $0xfc] sm:$0xf]
  %v372 = vunpack.c.l.b16 %v244
  %v373 = vunpack.c.l.b16 %v245
  %v374 = vunpack.c.l.b16 %v246
  %v375 = vunpack.c.l.b16 %v247
  %v376 = vunpack.c.l.b16 %v248
  %v377 = vunpack.c.l.b16 %v249
  %v378 = vunpack.c.l.b16 %v250
  %v379 = vunpack.c.l.b16 %v251
  %v380 = vunpack.c.l.b16 %v252
  %v381 = vunpack.c.l.b16 %v253
  %v382 = vunpack.c.l.b16 %v254
  %v383 = vunpack.c.l.b16 %v255
  %v384 = vunpack.c.l.b16 %v256
  %v385 = vunpack.c.l.b16 %v257
  %v386 = vunpack.c.l.b16 %v258
  %v387 = vunpack.c.l.b16 %v259
  %v388 = vunpack.c.l.b16 %v260
  %v389 = vunpack.c.l.b16 %v261
  %v390 = vunpack.c.l.b16 %v262
  %v391 = vunpack.c.l.b16 %v263
  %v392 = vunpack.c.l.b16 %v264
  %v393 = vunpack.c.l.b16 %v265
  %v394 = vunpack.c.l.b16 %v266
  %v395 = vunpack.c.l.b16 %v267
  %v396 = vunpack.c.l.b16 %v268
  %v397 = vunpack.c.l.b16 %v269
  %v398 = vunpack.c.l.b16 %v270
  %v399 = vunpack.c.l.b16 %v271
  %v400 = vunpack.c.l.b16 %v272
  %v401 = vunpack.c.l.b16 %v273
  %v402 = vunpack.c.l.b16 %v274
  %v403 = vunpack.c.l.b16 %v275
  %v404 = vunpack.c.l.b16 %v276
  %v405 = vunpack.c.l.b16 %v277
  %v406 = vunpack.c.l.b16 %v278
  %v407 = vunpack.c.l.b16 %v279
  %v408 = vunpack.c.l.b16 %v280
  %v409 = vunpack.c.l.b16 %v281
  %v410 = vunpack.c.l.b16 %v282
  %v411 = vunpack.c.l.b16 %v283
  %v412 = vunpack.c.l.b16 %v284
  %v413 = vunpack.c.l.b16 %v285
  %v414 = vunpack.c.l.b16 %v286
  %v415 = vunpack.c.l.b16 %v287
  %v416 = vunpack.c.l.b16 %v288
  %v417 = vunpack.c.l.b16 %v289
  %v418 = vunpack.c.l.b16 %v290
  %v419 = vunpack.c.l.b16 %v291
  %v420 = vunpack.c.l.b16 %v292
  %v421 = vunpack.c.l.b16 %v293
  %v422 = vunpack.c.l.b16 %v294
  %v423 = vunpack.c.l.b16 %v295
  %v424 = vunpack.c.l.b16 %v296
  %v425 = vunpack.c.l.b16 %v297
  %v426 = vunpack.c.l.b16 %v298
  %v427 = vunpack.c.l.b16 %v299
  %v428 = vunpack.c.l.b16 %v300
  %v429 = vunpack.c.l.b16 %v301
  %v430 = vunpack.c.l.b16 %v302
  %v431 = vunpack.c.l.b16 %v303
  %v432 = vunpack.c.l.b16 %v304
  %v433 = vunpack.c.l.b16 %v305
  %v434 = vunpack.c.l.b16 %v306
  %v435 = vunpack.c.l.b16 %v307
  %v436 = vpack.c.b16 %v373, %v372
  %v437 = vpack.c.b16 %v375, %v374
  %v438 = vpack.c.b16 %v377, %v376
  %v439 = vpack.c.b16 %v379, %v378
  %v440 = vpack.c.b16 %v381, %v380
  %v441 = vpack.c.b16 %v383, %v382
  %v442 = vpack.c.b16 %v385, %v384
  %v443 = vpack.c.b16 %v387, %v386
  %v444 = vpack.c.b16 %v389, %v388
  %v445 = vpack.c.b16 %v391, %v390
  %v446 = vpack.c.b16 %v393, %v392
  %v447 = vpack.c.b16 %v395, %v394
  %v448 = vpack.c.b16 %v397, %v396
  %v449 = vpack.c.b16 %v399, %v398
  %v450 = vpack.c.b16 %v401, %v400
  %v451 = vpack.c.b16 %v403, %v402
  %v452 = vpack.c.b16 %v405, %v404
  %v453 = vpack.c.b16 %v407, %v406
  %v454 = vpack.c.b16 %v409, %v408
  %v455 = vpack.c.b16 %v411, %v410
  %v456 = vpack.c.b16 %v413, %v412
  %v457 = vpack.c.b16 %v415, %v414
  %v458 = vpack.c.b16 %v417, %v416
  %v459 = vpack.c.b16 %v419, %v418
  %v460 = vpack.c.b16 %v421, %v420
  %v461 = vpack.c.b16 %v423, %v422
  %v462 = vpack.c.b16 %v425, %v424
  %v463 = vpack.c.b16 %v427, %v426
  %v464 = vpack.c.b16 %v429, %v428
  %v465 = vpack.c.b16 %v431, %v430
  %v466 = vpack.c.b16 %v433, %v432
  %v467 = vpack.c.b16 %v435, %v434
  %500 = vmatprep.subr.bf16.mxu0 0
  %501 = vmatpush1.bf16.msra.mxu0 %v443
  %502 = vmatprep.subr.bf16.mxu0 0
  %503 = vmatpush1.bf16.msra.mxu0 %v442
  %504 = vmatprep.subr.bf16.mxu0 0
  %505 = vmatpush1.bf16.msra.mxu0 %v441
  %506 = vmatprep.subr.bf16.mxu0 0
  %507 = vmatpush1.bf16.msra.mxu0 %v440
  %508 = vmatprep.subr.bf16.mxu0 0
  %509 = vmatpush1.bf16.msra.mxu0 %v439
  %510 = vmatprep.subr.bf16.mxu0 0
  %511 = vmatpush1.bf16.msra.mxu0 %v438
  %512 = vmatprep.subr.bf16.mxu0 0
  %513 = vmatpush1.bf16.msra.mxu0 %v437
  %514 = vmatprep.subr.bf16.mxu0 0
  %515 = vmatpush1.bf16.msra.mxu0 %v436
  %516 = vmatprep.subr.bf16.mxu0 0
  %517 = vmatpush2.bf16.msra.mxu0 %v451
  %518 = vmatprep.subr.bf16.mxu0 0
  %519 = vmatpush2.bf16.msra.mxu0 %v450
  %520 = vmatprep.subr.bf16.mxu0 0
  %521 = vmatpush2.bf16.msra.mxu0 %v449
  %522 = vmatprep.subr.bf16.mxu0 0
  %523 = vmatpush2.bf16.msra.mxu0 %v448
  %524 = vmatprep.subr.bf16.mxu0 0
  %525 = vmatpush2.bf16.msra.mxu0 %v447
  %526 = vmatprep.subr.bf16.mxu0 0
  %527 = vmatpush2.bf16.msra.mxu0 %v446
  %528 = vmatprep.subr.bf16.mxu0 0
  %529 = vmatpush2.bf16.msra.mxu0 %v445
  %530 = vmatprep.subr.bf16.mxu0 0
  %531 = vmatpush2.bf16.msra.mxu0 %v444
  %532 = vmatprep.mubr.bf16.mxu0 %v237
  %533 = vmatmul.mubr.bf16.gmra.mxu0 %v236
  %v534 = vpop.f32.mrf.mxu0
  %v535 = vadd.f32 0.0, %v534
  %v536 = vpop.f32.mrf.mxu0
  %v537 = vpop.f32.mrf.mxu0
  %v538 = vadd.f32 0.0, %v537
  %v539 = vpop.f32.mrf.mxu0
  %540 = vmatprep.mubr.bf16.mxu0 %v241
  %541 = vmatmul.mubr.bf16.gmra.mxu0 %v240
  %v542 = vpop.f32.mrf.mxu0
  %v543 = vadd.f32 0.0, %v542
  %v544 = vpop.f32.mrf.mxu0
  %v545 = vpop.f32.mrf.mxu0
  %v546 = vadd.f32 0.0, %v545
  %v547 = vpop.f32.mrf.mxu0
  %548 = vdwg.mxu0
  %549 = vmatprep.subr.bf16.mxu0 0
  %550 = vmatpush1.bf16.msra.mxu0 %v459
  %551 = vmatprep.subr.bf16.mxu0 0
  %552 = vmatpush1.bf16.msra.mxu0 %v458
  %553 = vmatprep.subr.bf16.mxu0 0
  %554 = vmatpush1.bf16.msra.mxu0 %v457
  %555 = vmatprep.subr.bf16.mxu0 0
  %556 = vmatpush1.bf16.msra.mxu0 %v456
  %557 = vmatprep.subr.bf16.mxu0 0
  %558 = vmatpush1.bf16.msra.mxu0 %v455
  %559 = vmatprep.subr.bf16.mxu0 0
  %560 = vmatpush1.bf16.msra.mxu0 %v454
  %561 = vmatprep.subr.bf16.mxu0 0
  %562 = vmatpush1.bf16.msra.mxu0 %v453
  %563 = vmatprep.subr.bf16.mxu0 0
  %564 = vmatpush1.bf16.msra.mxu0 %v452
  %565 = vmatprep.subr.bf16.mxu0 0
  %566 = vmatpush2.bf16.msra.mxu0 %v467
  %567 = vmatprep.subr.bf16.mxu0 0
  %568 = vmatpush2.bf16.msra.mxu0 %v466
  %569 = vmatprep.subr.bf16.mxu0 0
  %570 = vmatpush2.bf16.msra.mxu0 %v465
  %571 = vmatprep.subr.bf16.mxu0 0
  %572 = vmatpush2.bf16.msra.mxu0 %v464
  %573 = vmatprep.subr.bf16.mxu0 0
  %574 = vmatpush2.bf16.msra.mxu0 %v463
  %575 = vmatprep.subr.bf16.mxu0 0
  %576 = vmatpush2.bf16.msra.mxu0 %v462
  %577 = vmatprep.subr.bf16.mxu0 0
  %578 = vmatpush2.bf16.msra.mxu0 %v461
  %579 = vmatprep.subr.bf16.mxu0 0
  %580 = vmatpush2.bf16.msra.mxu0 %v460
  %581 = vmatprep.mubr.bf16.mxu0 %v239
  %582 = vmatmul.mubr.bf16.gmra.mxu0 %v238
  %v583 = vpop.f32.mrf.mxu0
  %v584 = vadd.f32 %v535, %v583
  %v585 = vpop.f32.mrf.mxu0
  %v586 = vpop.f32.mrf.mxu0
  %v587 = vadd.f32 %v538, %v586
  %v588 = vpop.f32.mrf.mxu0
  %589 = vmatprep.mubr.bf16.mxu0 %v243
  %590 = vmatmul.mubr.bf16.gmra.mxu0 %v242
  %v591 = vpop.f32.mrf.mxu0
  %v592 = vadd.f32 %v543, %v591
  %v593 = vpop.f32.mrf.mxu0
  %v594 = vpop.f32.mrf.mxu0
  %v595 = vadd.f32 %v546, %v594
  %v596 = vpop.f32.mrf.mxu0
  %597 = vdwg.mxu0
  %v598 = vpack.c.bf16 %v587, %v584
  %v599 = vpack.c.bf16 %v595, %v592
  %v600 = vld [vmem:[%s3] sm:$0xf]
  %v601 = vld [vmem:[%s3 + $0x4] sm:$0xf]
  %v602 = vld [vmem:[%s3 + $0x8] sm:$0xf]
  %v603 = vld [vmem:[%s3 + $0xc] sm:$0xf]
  %v604 = vld [vmem:[%s4] sm:$0x1]
  %v606 = vlaneseq
  %v607 = vshrl.u32 %v606, 7
  %v608 = vsub.s32 0, %v607
  %v609 = vrot.slane %v604, %v608
  %611 = vxpose.xlu0.c.b16.start [1/8] %v598, 128
  %612 = vxpose.xlu0.c.b16.cont [2/8] %v599, 128
  %613 = vxpose.xlu0.c.b16.cont [3/8] 0, 128
  %614 = vxpose.xlu0.c.b16.cont [4/8] 0, 128
  %615 = vxpose.xlu0.c.b16.cont [5/8] 0, 128
  %616 = vxpose.xlu0.c.b16.cont [6/8] 0, 128
  %617 = vxpose.xlu0.c.b16.cont [7/8] 0, 128
  %618 = vxpose.xlu0.c.b16.end [8/8] 0, 128
  %v619 = vpop.trf.xlu0
  %v620 = vpop.trf.xlu0
  %v621 = vpop.trf.xlu0
  %v622 = vpop.trf.xlu0
  %v623 = vpop.trf.xlu0
  %v624 = vpop.trf.xlu0
  %v625 = vpop.trf.xlu0
  %v626 = vpop.trf.xlu0
  %v631 = vunpack.c.l.b16 %v600
  %v632 = vunpack.c.l.b16 %v601
  %v633 = vunpack.c.l.b16 %v602
  %v634 = vunpack.c.l.b16 %v603
  %v635 = vpack.c.b16 %v632, %v631
  %v636 = vpack.c.b16 %v634, %v633
  %vm639 = vcmask 261120
  %v641 = vsel %vm639, %v619, 0
  %643 = vmatprep.subr.bf16.mxu0 0
  %644 = vmatpush1.bf16.msra.mxu0 0
  %645 = vmatprep.subr.bf16.mxu0 0
  %646 = vmatpush1.bf16.msra.mxu0 0
  %647 = vmatprep.subr.bf16.mxu0 0
  %648 = vmatpush1.bf16.msra.mxu0 0
  %649 = vmatprep.subr.bf16.mxu0 0
  %650 = vmatpush1.bf16.msra.mxu0 0
  %651 = vmatprep.subr.bf16.mxu0 0
  %652 = vmatpush1.bf16.msra.mxu0 0
  %653 = vmatprep.subr.bf16.mxu0 0
  %654 = vmatpush1.bf16.msra.mxu0 0
  %655 = vmatprep.subr.bf16.mxu0 0
  %656 = vmatpush1.bf16.msra.mxu0 %v636
  %657 = vmatprep.subr.bf16.mxu0 0
  %658 = vmatpush1.bf16.msra.mxu0 %v635
  %659 = vmatprep.subr.bf16.mxu0 0
  %660 = vmatpush2.bf16.msra.mxu0 0
  %661 = vmatprep.subr.bf16.mxu0 0
  %662 = vmatpush2.bf16.msra.mxu0 0
  %663 = vmatprep.subr.bf16.mxu0 0
  %664 = vmatpush2.bf16.msra.mxu0 0
  %665 = vmatprep.subr.bf16.mxu0 0
  %666 = vmatpush2.bf16.msra.mxu0 0
  %667 = vmatprep.subr.bf16.mxu0 0
  %668 = vmatpush2.bf16.msra.mxu0 0
  %669 = vmatprep.subr.bf16.mxu0 0
  %670 = vmatpush2.bf16.msra.mxu0 0
  %671 = vmatprep.subr.bf16.mxu0 0
  %672 = vmatpush2.bf16.msra.mxu0 0
  %673 = vmatprep.subr.bf16.mxu0 0
  %674 = vmatpush2.bf16.msra.mxu0 0
  %675 = vmatprep.mubr.bf16.mxu0 0
  %676 = vmatmul.mubr.bf16.gmra.mxu0 %v641
  %v677 = vpop.f32.mrf.mxu0
  %v678 = vadd.f32 %v609, %v677
  %v679 = vpop.f32.mrf.mxu0
  %v680 = vpop.f32.mrf.mxu0
  %v681 = vpop.f32.mrf.mxu0
  %682 = vdwg.mxu0
  %683 = vst [vmem:[%s5] sm:$0xff] %v678
  // Predicated region
  $region22: #{classifier_forward.1} parent=0 // pred_check
    _
  $region23: #{classifier_forward.1} parent=0 // pred_check_branch
    %685 = sbr.rel (0) target = $region25
  $region24: #{classifier_forward.1} parent=0 // pred_region
    _
  $region25: #{classifier_forward.1} parent=0 // pred_fallthru
    _
  // Predicated region
  $region26: #{classifier_forward.1} parent=0 // pred_check
    _
  $region27: #{classifier_forward.1} parent=0 // pred_check_branch
    %687 = sbr.rel (0) target = $region29
  $region28: #{classifier_forward.1} parent=0 // pred_region
    _
  $region29: #{classifier_forward.1} parent=0 // pred_fallthru
    _

</llo_original>
